<compile_context>
chip_gen: v7x
topology: tpu7x:2x2x1
jax: 0.10.0
libtpu: 0.0.40
codegen_flags: <defaults>
</compile_context>

<pallas_src>
import functools
import math

import jax
import jax.numpy as jnp
from jax import lax
from jax.experimental import pallas as pl
from jax.experimental.pallas import tpu as pltpu


def _round_up(x, m):
    return ((x + m - 1) // m) * m


def wordsequence_cnn_kernel(x_ref, w2c_w_ref, w2c_b_ref,
                            conv_w_ref, conv_b_ref,
                            bn_scale_ref, bn_shift_ref,
                            h2t_w_ref, h2t_b_ref,
                            out_ref, *, cnn_layer, seq_len, hidden, packed_taps):
    """One grid step processes rows = (#sequences-per-block * seq_len) rows.

    x_ref:        (rows, D)   f32   flattened word_represent rows (un-padded D)
    w2c_w_ref:    (D, Hp)     bf16
    w2c_b_ref:    (1, Hp)     f32
    conv_w_ref:   (cnn_layer, Kp, Hp) bf16  taps packed along K
    conv_b_ref:   (cnn_layer, 1, Hp)  f32
    bn_scale_ref: (cnn_layer, 1, Hp)  f32   (last layer's entry folded into h2t)
    bn_shift_ref: (cnn_layer, 1, Hp)  f32
    h2t_w_ref:    (Hp, Tp)    bf16  last BN + ablation mask pre-folded
    h2t_b_ref:    (1, Tp)     f32
    out_ref:      (rows, Tp)  f32
    """
    f32, bf16 = jnp.float32, jnp.bfloat16

    # word2cnn linear (bf16 MXU, f32 accumulate) + tanh in f32
    x = x_ref[...].astype(bf16)                                   # (rows, D)
    h = jnp.tanh(jnp.dot(x, w2c_w_ref[...], preferred_element_type=f32)
                 + w2c_b_ref[...])                                # (rows, Hp) f32

    rows, Hp = h.shape
    Kp = conv_w_ref.shape[1]

    # (rows, 1) boundary masks; rows are whole sequences laid back to back.
    row = lax.broadcasted_iota(jnp.int32, (rows, 1), 0)
    if (seq_len & (seq_len - 1)) == 0:        # power of two: avoid integer %
        pos = row & (seq_len - 1)
    else:
        pos = row % seq_len
    has_left = pos != 0                       # row has a valid left neighbor
    has_right = pos != (seq_len - 1)          # row has a valid right neighbor

    zero_row = jnp.zeros((1, Hp), f32)        # hoisted out of the layer loop
    if packed_taps and Kp > 3 * hidden:
        lane_pad = jnp.zeros((rows, Kp - 3 * hidden), f32)

    for idx in range(cnn_layer):                                  # static unroll
        # k=3 same-padding Conv1d: neighbor rows via sublane slice+concat
        # against a zero halo row; masks stop leakage across sequences.
        x_left = jnp.where(has_left,
                           jnp.concatenate([zero_row, h[:-1, :]], axis=0), 0.0)
        x_right = jnp.where(has_right,
                            jnp.concatenate([h[1:, :], zero_row], axis=0), 0.0)
        if packed_taps:
            # pack taps [x_{l-1} | x_l | x_{l+1}] into one Kp-lane group so the
            # conv is a single (rows, Kp) x (Kp, Hp) MXU pass (Kp = 128 at H=32).
            pieces = [x_left[:, :hidden], h[:, :hidden], x_right[:, :hidden]]
            if Kp > 3 * hidden:
                pieces.append(lane_pad)
            x_cat = jnp.concatenate(pieces, axis=1)
        else:
            x_cat = jnp.concatenate([x_left, h, x_right], axis=1)
        y = (jnp.dot(x_cat.astype(bf16), conv_w_ref[idx],
                     preferred_element_type=f32)
             + conv_b_ref[idx])
        y = jnp.maximum(y, 0.0)               # ReLU; Dropout is identity in eval
        if idx < cnn_layer - 1:
            # eval-mode BatchNorm1d = per-channel affine (f32 on the VPU)
            y = y * bn_scale_ref[idx] + bn_shift_ref[idx]
        h = y
    # Last layer's BN affine and the neuron-ablation mask are folded into
    # hidden2tag's weights/bias by the wrapper.

    out_ref[...] = (jnp.dot(h.astype(bf16), h2t_w_ref[...],
                            preferred_element_type=f32)
                    + h2t_b_ref[...]).astype(out_ref.dtype)


def wordsequence_cnn_forward(word_represent, params, ablate_mask, *,
                             cnn_layer, target_rows=1024):
    """word_represent: (B, L, D) float32.  Returns (B, L, T) float32."""
    B, L, D = word_represent.shape
    H = params["w2c_w"].shape[1]
    T = params["h2t_w"].shape[1]
    f32, bf16 = jnp.float32, jnp.bfloat16

    Hp = _round_up(H, 128)
    Tp = _round_up(T, 128)
    packed_taps = (3 * H) <= Hp               # all 3 taps fit one lane group set
    Kp = Hp if packed_taps else 3 * Hp

    # ---------- one-time weight preprocessing (outside the kernel) ----------
    w2c_w = jnp.zeros((D, Hp), f32).at[:, :H].set(params["w2c_w"]).astype(bf16)
    w2c_b = jnp.zeros((1, Hp), f32).at[:, :H].set(params["w2c_b"])

    # Pack the 3 conv taps along the contraction axis -> single (Kp, Hp) matmul.
    conv_w = jnp.zeros((cnn_layer, Kp, Hp), f32)
    for tap in range(3):
        off = tap * H if packed_taps else tap * Hp
        conv_w = conv_w.at[:, off:off + H, :H].set(params["conv_w"][:, tap])
    conv_w = conv_w.astype(bf16)
    conv_b = jnp.zeros((cnn_layer, 1, Hp), f32).at[:, :, :H].set(params["conv_b"])

    bn_scale = jnp.zeros((cnn_layer, 1, Hp), f32).at[:, :, :H].set(params["bn_scale"])
    bn_shift = jnp.zeros((cnn_layer, 1, Hp), f32).at[:, :, :H].set(params["bn_shift"])

    # Fold last layer's BN affine + neuron-ablation mask into hidden2tag:
    #   out = ((y*s + t) * m) @ W + b = y @ (diag(s*m) W) + ((t*m) @ W + b)
    eff_scale = params["bn_scale"][cnn_layer - 1, 0] * ablate_mask[0]   # (H,)
    eff_shift = params["bn_shift"][cnn_layer - 1, 0] * ablate_mask[0]   # (H,)
    h2t_w_f = params["h2t_w"] * eff_scale[:, None]
    h2t_b_f = params["h2t_b"] + eff_shift[None, :] @ params["h2t_w"]
    h2t_w = jnp.zeros((Hp, Tp), f32).at[:H, :T].set(h2t_w_f).astype(bf16)
    h2t_b = jnp.zeros((1, Tp), f32).at[:, :T].set(h2t_b_f)

    # ---------- block sizing: whole sequences per block, 8-aligned rows ----------
    g = 8 // math.gcd(L, 8)                    # min #sequences for 8-aligned rows
    seqs = max(g, (max(target_rows // L, 1) // g) * g)
    seqs = min(seqs, _round_up(B, g))

    weight_bytes = 2 * (w2c_w.size + conv_w.size + h2t_w.size) + 4 * (
        w2c_b.size + conv_b.size + bn_scale.size + bn_shift.size + h2t_b.size)

    def vmem_estimate(s):
        r = s * L
        io = 2 * r * D * 4 + 2 * r * Tp * 4    # double-buffered in/out blocks
        tmp = 8 * r * Hp * 4                   # in-kernel temporaries (h, taps, x_cat)
        return 2 * weight_bytes + io + tmp

    vmem_budget = 40 * (1 << 20)               # headroom under v7x's 64 MiB VMEM
    while seqs > g and vmem_estimate(seqs) > vmem_budget:
        seqs -= g

    # Prefer >= 2 grid steps so the 'parallel' axis can shard across v7x's 2 TCs.
    if _round_up(B, seqs) // seqs < 2 and seqs >= 2 * g:
        seqs = max(g, ((seqs // 2) // g) * g)

    Bp = _round_up(B, seqs)
    rows = seqs * L
    Np = Bp * L
    grid = (Bp // seqs,)

    # Activations stay un-padded in D (full-array last dim -> no 128 rule issue,
    # no extra HBM pad pass); only the row count is padded to the block multiple.
    x = word_represent.reshape(B * L, D).astype(f32)
    if Np != B * L:
        x = jnp.concatenate([x, jnp.zeros((Np - B * L, D), f32)], axis=0)

    kernel = functools.partial(wordsequence_cnn_kernel, cnn_layer=cnn_layer,
                               seq_len=L, hidden=H, packed_taps=packed_taps)

    # Constant index_map -> weights stay VMEM-resident across grid steps.
    resident = lambda shape: pl.BlockSpec(shape, lambda i: (0,) * len(shape))

    out_padded = pl.pallas_call(
        kernel,
        out_shape=jax.ShapeDtypeStruct((Np, Tp), f32),
        grid_spec=pltpu.PrefetchScalarGridSpec(
            num_scalar_prefetch=0,
            grid=grid,
            in_specs=[
                pl.BlockSpec((rows, D), lambda i: (i, 0)),   # activations
                resident((D, Hp)),                           # word2cnn W (bf16)
                resident((1, Hp)),                           # word2cnn b
                resident((cnn_layer, Kp, Hp)),               # packed conv W (bf16)
                resident((cnn_layer, 1, Hp)),                # conv b
                resident((cnn_layer, 1, Hp)),                # bn scale
                resident((cnn_layer, 1, Hp)),                # bn shift
                resident((Hp, Tp)),                          # hidden2tag W (folded, bf16)
                resident((1, Tp)),                           # hidden2tag b (folded)
            ],
            out_specs=pl.BlockSpec((rows, Tp), lambda i: (i, 0)),
        ),
        compiler_params=pltpu.CompilerParams(
            dimension_semantics=("parallel",),
            vmem_limit_bytes=48 * 1024 * 1024),
    )(x, w2c_w, w2c_b, conv_w, conv_b, bn_scale, bn_shift, h2t_w, h2t_b)

    return out_padded[:B * L].reshape(B, L, Tp)[:, :, :T]


if __name__ == "__main__":
    # ---- small, deterministic configuration consistent with the module ----
    B = 2            # batch_size
    L = 8            # sent_len
    WORD_EMB = 24    # data.word_emb_dim
    FEAT_EMB = 8     # data.feature_emb_dims[0], feature_num = 1
    D = WORD_EMB + FEAT_EMB          # self.input_size (use_char = False)
    H = 32           # data.HP_hidden_dim
    CNN_LAYER = 2    # data.HP_cnn_layer
    T = 16           # data.label_alphabet_size
    VOCAB = 50
    FEAT_VOCAB = 10
    ABLATE_NUM = 5   # ablate the first 5 neurons of feature_order

    key = jax.random.PRNGKey(0)
    keys = jax.random.split(key, 12)

    # ---- WordRep (glue): embedding lookup + feature embedding concat ----
    word_emb_table = jax.random.normal(keys[0], (VOCAB, WORD_EMB), jnp.float32) * 0.1
    feat_emb_table = jax.random.normal(keys[1], (FEAT_VOCAB, FEAT_EMB), jnp.float32) * 0.1
    word_inputs = jax.random.randint(keys[2], (B, L), 0, VOCAB)
    feature_inputs = jax.random.randint(keys[3], (B, L), 0, FEAT_VOCAB)
    word_represent = jnp.concatenate(
        [jnp.take(word_emb_table, word_inputs, axis=0),
         jnp.take(feat_emb_table, feature_inputs, axis=0)],
        axis=-1)                                               # (B, L, D)

    # ---- deterministic parameter init (shapes from __init__) ----
    # word2cnn: nn.Linear(D, H)  -> stored as (in, out)
    w2c_w = jax.random.normal(keys[4], (D, H), jnp.float32) * 0.1
    w2c_b = jax.random.normal(keys[5], (1, H), jnp.float32) * 0.1

    # cnn_list: Conv1d(H, H, kernel=3, pad=1); PyTorch weight is (out, in, 3)
    conv_w_pt = jax.random.normal(keys[6], (CNN_LAYER, H, H, 3), jnp.float32) * 0.1
    # -> (layer, tap, in, out), tap order matches x_{l-1}, x_l, x_{l+1}
    conv_w = jnp.transpose(conv_w_pt, (0, 3, 2, 1))
    conv_b = jax.random.normal(keys[7], (CNN_LAYER, 1, H), jnp.float32) * 0.1

    # BatchNorm1d(H) in eval mode, deterministic running stats folded to affine
    gamma = 1.0 + 0.05 * jnp.arange(H, dtype=jnp.float32)[None].repeat(CNN_LAYER, 0)
    beta = 0.01 * jnp.arange(H, dtype=jnp.float32)[None].repeat(CNN_LAYER, 0)
    running_mean = 0.02 * jnp.arange(H, dtype=jnp.float32)[None].repeat(CNN_LAYER, 0)
    running_var = 1.0 + 0.1 * jnp.arange(H, dtype=jnp.float32)[None].repeat(CNN_LAYER, 0)
    eps = 1e-5
    bn_scale = (gamma / jnp.sqrt(running_var + eps))[:, None, :]      # (layer, 1, H)
    bn_shift = (beta - running_mean * gamma / jnp.sqrt(running_var + eps))[:, None, :]

    # hidden2tag: nn.Linear(H, T) -> stored as (in, out)
    h2t_w = jax.random.normal(keys[8], (H, T), jnp.float32) * 0.1
    h2t_b = jax.random.normal(keys[9], (1, T), jnp.float32) * 0.1

    # ---- ablation mask (data.ablate_list[tag][:current_ablate_ind]) ----
    feature_order = list(jax.random.permutation(keys[10], H))
    mask = jnp.ones((H,), jnp.float32)
    ablate_idx = jnp.array(feature_order[:ABLATE_NUM], dtype=jnp.int32)
    mask = mask.at[ablate_idx].set(0.0)
    ablate_mask = mask[None, :]                                       # (1, H)

    params = dict(w2c_w=w2c_w, w2c_b=w2c_b, conv_w=conv_w, conv_b=conv_b,
                  bn_scale=bn_scale, bn_shift=bn_shift,
                  h2t_w=h2t_w, h2t_b=h2t_b)

    outputs = wordsequence_cnn_forward(word_represent, params, ablate_mask,
                                       cnn_layer=CNN_LAYER)
    outputs = jax.block_until_ready(outputs)

    # ---- pure-JAX reference check (original, unfused/unfolded f32 math) ----
    def ref(x):
        h = jnp.tanh(x @ w2c_w + w2c_b)                               # (B, L, H)
        for i in range(CNN_LAYER):
            xp = jnp.pad(h, ((0, 0), (1, 1), (0, 0)))
            y = (xp[:, :-2] @ conv_w[i, 0] + xp[:, 1:-1] @ conv_w[i, 1]
                 + xp[:, 2:] @ conv_w[i, 2] + conv_b[i])
            y = jnp.maximum(y, 0.0)
            h = y * bn_scale[i] + bn_shift[i]
        h = h * ablate_mask
        return h @ h2t_w + h2t_b

    expected = ref(word_represent)
    assert outputs.shape == (B, L, T)
    # bf16 MXU operands with f32 accumulation -> loosened tolerance vs f32 ref
    assert jnp.allclose(outputs, expected, atol=2e-2, rtol=2e-2), (
        float(jnp.max(jnp.abs(outputs - expected))))

    print("KERNEL_OK")
</pallas_src>

<mosaic_0001>
module attributes {stable_mosaic.version = 11 : i64} {
  func.func @wordsequence_cnn_kernel(%arg0: i32, %arg1: memref<8x32xf32, #tpu.memory_space<vmem>>, %arg2: memref<32x128xbf16, #tpu.memory_space<vmem>>, %arg3: memref<1x128xf32, #tpu.memory_space<vmem>>, %arg4: memref<2x128x128xbf16, #tpu.memory_space<vmem>>, %arg5: memref<2x1x128xf32, #tpu.memory_space<vmem>>, %arg6: memref<2x1x128xf32, #tpu.memory_space<vmem>>, %arg7: memref<2x1x128xf32, #tpu.memory_space<vmem>>, %arg8: memref<128x128xbf16, #tpu.memory_space<vmem>>, %arg9: memref<1x128xf32, #tpu.memory_space<vmem>>, %arg10: memref<8x128xf32, #tpu.memory_space<vmem>>) attributes {dimension_semantics = [#tpu.dimension_semantics<parallel>], iteration_bounds = array<i64: 2>, scalar_prefetch = 0 : i64, scratch_operands = 0 : i64, tpu.core_type = #tpu.core_type<tc>, window_params = [{transform_indices = @transform_0, window_bounds = array<i64: 8, 32>}, {pipeline_mode = #tpu.pipeline_mode<synchronous>, transform_indices = @transform_1, window_bounds = array<i64: 32, 128>}, {pipeline_mode = #tpu.pipeline_mode<synchronous>, transform_indices = @transform_2, window_bounds = array<i64: 1, 128>}, {pipeline_mode = #tpu.pipeline_mode<synchronous>, transform_indices = @transform_3, window_bounds = array<i64: 2, 128, 128>}, {pipeline_mode = #tpu.pipeline_mode<synchronous>, transform_indices = @transform_4, window_bounds = array<i64: 2, 1, 128>}, {pipeline_mode = #tpu.pipeline_mode<synchronous>, transform_indices = @transform_5, window_bounds = array<i64: 2, 1, 128>}, {pipeline_mode = #tpu.pipeline_mode<synchronous>, transform_indices = @transform_6, window_bounds = array<i64: 2, 1, 128>}, {pipeline_mode = #tpu.pipeline_mode<synchronous>, transform_indices = @transform_7, window_bounds = array<i64: 128, 128>}, {pipeline_mode = #tpu.pipeline_mode<synchronous>, transform_indices = @transform_8, window_bounds = array<i64: 1, 128>}, {transform_indices = @transform_9, window_bounds = array<i64: 8, 128>}]} {
    %c0 = arith.constant 0 : index
    %c0_0 = arith.constant 0 : index
    %0 = vector.load %arg1[%c0, %c0_0] : memref<8x32xf32, #tpu.memory_space<vmem>>, vector<8x32xf32>
    %1 = arith.truncf %0 : vector<8x32xf32> to vector<8x32xbf16>
    %c0_1 = arith.constant 0 : index
    %c0_2 = arith.constant 0 : index
    %2 = vector.load %arg2[%c0_1, %c0_2] : memref<32x128xbf16, #tpu.memory_space<vmem>>, vector<32x128xbf16>
    %cst = arith.constant dense<0.000000e+00> : vector<8x128xf32>
    %3 = tpu.matmul %1, %2, %cst {dimension_numbers = #tpu.dot_dimension_numbers<[1], [0], [0], [1], [0, 0, 1, 1], [], []>} : vector<8x32xbf16>, vector<32x128xbf16>, vector<8x128xf32> -> vector<8x128xf32>
    %c0_3 = arith.constant 0 : index
    %c0_4 = arith.constant 0 : index
    %4 = vector.load %arg3[%c0_3, %c0_4] : memref<1x128xf32, #tpu.memory_space<vmem>>, vector<1x128xf32>
    %5 = vector.broadcast %4 : vector<1x128xf32> to vector<8x128xf32>
    %6 = arith.addf %3, %5 : vector<8x128xf32>
    %7 = math.tanh %6 : vector<8x128xf32>
    %8 = tpu.iota {dimensions = array<i32: 0>} : vector<8x1xi32>
    %c7_i32 = arith.constant 7 : i32
    %9 = vector.broadcast %c7_i32 : i32 to vector<8x1xi32>
    %10 = arith.andi %8, %9 : vector<8x1xi32>
    %c0_i32 = arith.constant 0 : i32
    %11 = vector.broadcast %c0_i32 : i32 to vector<8x1xi32>
    %12 = arith.cmpi ne, %10, %11 : vector<8x1xi32>
    %c7_i32_5 = arith.constant 7 : i32
    %13 = vector.broadcast %c7_i32_5 : i32 to vector<8x1xi32>
    %14 = arith.cmpi ne, %10, %13 : vector<8x1xi32>
    %cst_6 = arith.constant 0.000000e+00 : f32
    %15 = vector.broadcast %cst_6 : f32 to vector<1x128xf32>
    %cst_7 = arith.constant 0.000000e+00 : f32
    %16 = vector.broadcast %cst_7 : f32 to vector<8x32xf32>
    %17 = vector.extract_strided_slice %7 {offsets = [0, 0], sizes = [7, 128], strides = [1, 1]} : vector<8x128xf32> to vector<7x128xf32>
    %18 = tpu.concatenate %15, %17 in 0 : vector<1x128xf32>, vector<7x128xf32> -> vector<8x128xf32>
    %cst_8 = arith.constant 0.000000e+00 : f32
    %19 = vector.shape_cast %12 : vector<8x1xi1> to vector<8x1xi1>
    %20 = vector.broadcast %19 : vector<8x1xi1> to vector<8x128xi1>
    %21 = vector.broadcast %cst_8 : f32 to vector<8x128xf32>
    %22 = arith.select %20, %18, %21 : vector<8x128xi1>, vector<8x128xf32>
    %23 = vector.extract_strided_slice %7 {offsets = [1, 0], sizes = [7, 128], strides = [1, 1]} : vector<8x128xf32> to vector<7x128xf32>
    %24 = tpu.concatenate %23, %15 in 0 : vector<7x128xf32>, vector<1x128xf32> -> vector<8x128xf32>
    %cst_9 = arith.constant 0.000000e+00 : f32
    %25 = vector.shape_cast %14 : vector<8x1xi1> to vector<8x1xi1>
    %26 = vector.broadcast %25 : vector<8x1xi1> to vector<8x128xi1>
    %27 = vector.broadcast %cst_9 : f32 to vector<8x128xf32>
    %28 = arith.select %26, %24, %27 : vector<8x128xi1>, vector<8x128xf32>
    %29 = vector.extract_strided_slice %22 {offsets = [0, 0], sizes = [8, 32], strides = [1, 1]} : vector<8x128xf32> to vector<8x32xf32>
    %30 = vector.extract_strided_slice %7 {offsets = [0, 0], sizes = [8, 32], strides = [1, 1]} : vector<8x128xf32> to vector<8x32xf32>
    %31 = vector.extract_strided_slice %28 {offsets = [0, 0], sizes = [8, 32], strides = [1, 1]} : vector<8x128xf32> to vector<8x32xf32>
    %32 = tpu.concatenate %29, %30, %31, %16 in 1 : vector<8x32xf32>, vector<8x32xf32>, vector<8x32xf32>, vector<8x32xf32> -> vector<8x128xf32>
    %33 = arith.truncf %32 : vector<8x128xf32> to vector<8x128xbf16>
    %c0_10 = arith.constant 0 : index
    %c0_11 = arith.constant 0 : index
    %c0_12 = arith.constant 0 : index
    %34 = vector.load %arg4[%c0_10, %c0_11, %c0_12] : memref<2x128x128xbf16, #tpu.memory_space<vmem>>, vector<1x128x128xbf16>
    %35 = vector.shape_cast %34 : vector<1x128x128xbf16> to vector<128x128xbf16>
    %cst_13 = arith.constant dense<0.000000e+00> : vector<8x128xf32>
    %36 = tpu.matmul %33, %35, %cst_13 {dimension_numbers = #tpu.dot_dimension_numbers<[1], [0], [0], [1], [0, 0, 1, 1], [], []>} : vector<8x128xbf16>, vector<128x128xbf16>, vector<8x128xf32> -> vector<8x128xf32>
    %c0_14 = arith.constant 0 : index
    %c0_15 = arith.constant 0 : index
    %c0_16 = arith.constant 0 : index
    %37 = vector.load %arg5[%c0_14, %c0_15, %c0_16] : memref<2x1x128xf32, #tpu.memory_space<vmem>>, vector<1x1x128xf32>
    %38 = vector.shape_cast %37 : vector<1x1x128xf32> to vector<1x128xf32>
    %39 = vector.broadcast %38 : vector<1x128xf32> to vector<8x128xf32>
    %40 = arith.addf %36, %39 : vector<8x128xf32>
    %cst_17 = arith.constant 0.000000e+00 : f32
    %41 = vector.broadcast %cst_17 : f32 to vector<8x128xf32>
    %42 = arith.maximumf %40, %41 : vector<8x128xf32>
    %c0_18 = arith.constant 0 : index
    %c0_19 = arith.constant 0 : index
    %c0_20 = arith.constant 0 : index
    %43 = vector.load %arg6[%c0_18, %c0_19, %c0_20] : memref<2x1x128xf32, #tpu.memory_space<vmem>>, vector<1x1x128xf32>
    %44 = vector.shape_cast %43 : vector<1x1x128xf32> to vector<1x128xf32>
    %45 = vector.broadcast %44 : vector<1x128xf32> to vector<8x128xf32>
    %46 = arith.mulf %42, %45 : vector<8x128xf32>
    %c0_21 = arith.constant 0 : index
    %c0_22 = arith.constant 0 : index
    %c0_23 = arith.constant 0 : index
    %47 = vector.load %arg7[%c0_21, %c0_22, %c0_23] : memref<2x1x128xf32, #tpu.memory_space<vmem>>, vector<1x1x128xf32>
    %48 = vector.shape_cast %47 : vector<1x1x128xf32> to vector<1x128xf32>
    %49 = vector.broadcast %48 : vector<1x128xf32> to vector<8x128xf32>
    %50 = arith.addf %46, %49 : vector<8x128xf32>
    %51 = vector.extract_strided_slice %50 {offsets = [0, 0], sizes = [7, 128], strides = [1, 1]} : vector<8x128xf32> to vector<7x128xf32>
    %52 = tpu.concatenate %15, %51 in 0 : vector<1x128xf32>, vector<7x128xf32> -> vector<8x128xf32>
    %cst_24 = arith.constant 0.000000e+00 : f32
    %53 = vector.shape_cast %12 : vector<8x1xi1> to vector<8x1xi1>
    %54 = vector.broadcast %53 : vector<8x1xi1> to vector<8x128xi1>
    %55 = vector.broadcast %cst_24 : f32 to vector<8x128xf32>
    %56 = arith.select %54, %52, %55 : vector<8x128xi1>, vector<8x128xf32>
    %57 = vector.extract_strided_slice %50 {offsets = [1, 0], sizes = [7, 128], strides = [1, 1]} : vector<8x128xf32> to vector<7x128xf32>
    %58 = tpu.concatenate %57, %15 in 0 : vector<7x128xf32>, vector<1x128xf32> -> vector<8x128xf32>
    %cst_25 = arith.constant 0.000000e+00 : f32
    %59 = vector.shape_cast %14 : vector<8x1xi1> to vector<8x1xi1>
    %60 = vector.broadcast %59 : vector<8x1xi1> to vector<8x128xi1>
    %61 = vector.broadcast %cst_25 : f32 to vector<8x128xf32>
    %62 = arith.select %60, %58, %61 : vector<8x128xi1>, vector<8x128xf32>
    %63 = vector.extract_strided_slice %56 {offsets = [0, 0], sizes = [8, 32], strides = [1, 1]} : vector<8x128xf32> to vector<8x32xf32>
    %64 = vector.extract_strided_slice %50 {offsets = [0, 0], sizes = [8, 32], strides = [1, 1]} : vector<8x128xf32> to vector<8x32xf32>
    %65 = vector.extract_strided_slice %62 {offsets = [0, 0], sizes = [8, 32], strides = [1, 1]} : vector<8x128xf32> to vector<8x32xf32>
    %66 = tpu.concatenate %63, %64, %65, %16 in 1 : vector<8x32xf32>, vector<8x32xf32>, vector<8x32xf32>, vector<8x32xf32> -> vector<8x128xf32>
    %67 = arith.truncf %66 : vector<8x128xf32> to vector<8x128xbf16>
    %c1 = arith.constant 1 : index
    %c0_26 = arith.constant 0 : index
    %c0_27 = arith.constant 0 : index
    %68 = vector.load %arg4[%c1, %c0_26, %c0_27] : memref<2x128x128xbf16, #tpu.memory_space<vmem>>, vector<1x128x128xbf16>
    %69 = vector.shape_cast %68 : vector<1x128x128xbf16> to vector<128x128xbf16>
    %cst_28 = arith.constant dense<0.000000e+00> : vector<8x128xf32>
    %70 = tpu.matmul %67, %69, %cst_28 {dimension_numbers = #tpu.dot_dimension_numbers<[1], [0], [0], [1], [0, 0, 1, 1], [], []>} : vector<8x128xbf16>, vector<128x128xbf16>, vector<8x128xf32> -> vector<8x128xf32>
    %c1_29 = arith.constant 1 : index
    %c0_30 = arith.constant 0 : index
    %c0_31 = arith.constant 0 : index
    %71 = vector.load %arg5[%c1_29, %c0_30, %c0_31] : memref<2x1x128xf32, #tpu.memory_space<vmem>>, vector<1x1x128xf32>
    %72 = vector.shape_cast %71 : vector<1x1x128xf32> to vector<1x128xf32>
    %73 = vector.broadcast %72 : vector<1x128xf32> to vector<8x128xf32>
    %74 = arith.addf %70, %73 : vector<8x128xf32>
    %cst_32 = arith.constant 0.000000e+00 : f32
    %75 = vector.broadcast %cst_32 : f32 to vector<8x128xf32>
    %76 = arith.maximumf %74, %75 : vector<8x128xf32>
    %77 = arith.truncf %76 : vector<8x128xf32> to vector<8x128xbf16>
    %c0_33 = arith.constant 0 : index
    %c0_34 = arith.constant 0 : index
    %78 = vector.load %arg8[%c0_33, %c0_34] : memref<128x128xbf16, #tpu.memory_space<vmem>>, vector<128x128xbf16>
    %cst_35 = arith.constant dense<0.000000e+00> : vector<8x128xf32>
    %79 = tpu.matmul %77, %78, %cst_35 {dimension_numbers = #tpu.dot_dimension_numbers<[1], [0], [0], [1], [0, 0, 1, 1], [], []>} : vector<8x128xbf16>, vector<128x128xbf16>, vector<8x128xf32> -> vector<8x128xf32>
    %c0_36 = arith.constant 0 : index
    %c0_37 = arith.constant 0 : index
    %80 = vector.load %arg9[%c0_36, %c0_37] : memref<1x128xf32, #tpu.memory_space<vmem>>, vector<1x128xf32>
    %81 = vector.broadcast %80 : vector<1x128xf32> to vector<8x128xf32>
    %82 = arith.addf %79, %81 : vector<8x128xf32>
    %c0_38 = arith.constant 0 : index
    %c0_39 = arith.constant 0 : index
    %83 = vector.load %arg10[%c0_38, %c0_39] : memref<8x128xf32, #tpu.memory_space<vmem>>, vector<8x128xf32>
    tpu.vector_store %arg10[%c0_38, %c0_39], %82 {strides = array<i32>} : memref<8x128xf32, #tpu.memory_space<vmem>>, vector<8x128xf32>,
    return
  }
  func.func @transform_0(%arg0: i32) -> (i32, i32) {
    %c0_i32 = arith.constant 0 : i32
    %c0_i32_0 = arith.constant 0 : i32
    return %arg0, %c0_i32 : i32, i32
  }
  func.func @transform_1(%arg0: i32) -> (i32, i32) {
    %c0_i32 = arith.constant 0 : i32
    %c0_i32_0 = arith.constant 0 : i32
    %c0_i32_1 = arith.constant 0 : i32
    return %c0_i32, %c0_i32_0 : i32, i32
  }
  func.func @transform_2(%arg0: i32) -> (i32, i32) {
    %c0_i32 = arith.constant 0 : i32
    %c0_i32_0 = arith.constant 0 : i32
    %c0_i32_1 = arith.constant 0 : i32
    return %c0_i32, %c0_i32_0 : i32, i32
  }
  func.func @transform_3(%arg0: i32) -> (i32, i32, i32) {
    %c0_i32 = arith.constant 0 : i32
    %c0_i32_0 = arith.constant 0 : i32
    %c0_i32_1 = arith.constant 0 : i32
    %c0_i32_2 = arith.constant 0 : i32
    return %c0_i32, %c0_i32_0, %c0_i32_1 : i32, i32, i32
  }
  func.func @transform_4(%arg0: i32) -> (i32, i32, i32) {
    %c0_i32 = arith.constant 0 : i32
    %c0_i32_0 = arith.constant 0 : i32
    %c0_i32_1 = arith.constant 0 : i32
    %c0_i32_2 = arith.constant 0 : i32
    return %c0_i32, %c0_i32_0, %c0_i32_1 : i32, i32, i32
  }
  func.func @transform_5(%arg0: i32) -> (i32, i32, i32) {
    %c0_i32 = arith.constant 0 : i32
    %c0_i32_0 = arith.constant 0 : i32
    %c0_i32_1 = arith.constant 0 : i32
    %c0_i32_2 = arith.constant 0 : i32
    return %c0_i32, %c0_i32_0, %c0_i32_1 : i32, i32, i32
  }
  func.func @transform_6(%arg0: i32) -> (i32, i32, i32) {
    %c0_i32 = arith.constant 0 : i32
    %c0_i32_0 = arith.constant 0 : i32
    %c0_i32_1 = arith.constant 0 : i32
    %c0_i32_2 = arith.constant 0 : i32
    return %c0_i32, %c0_i32_0, %c0_i32_1 : i32, i32, i32
  }
  func.func @transform_7(%arg0: i32) -> (i32, i32) {
    %c0_i32 = arith.constant 0 : i32
    %c0_i32_0 = arith.constant 0 : i32
    %c0_i32_1 = arith.constant 0 : i32
    return %c0_i32, %c0_i32_0 : i32, i32
  }
  func.func @transform_8(%arg0: i32) -> (i32, i32) {
    %c0_i32 = arith.constant 0 : i32
    %c0_i32_0 = arith.constant 0 : i32
    %c0_i32_1 = arith.constant 0 : i32
    return %c0_i32, %c0_i32_0 : i32, i32
  }
  func.func @transform_9(%arg0: i32) -> (i32, i32) {
    %c0_i32 = arith.constant 0 : i32
    %c0_i32_0 = arith.constant 0 : i32
    return %arg0, %c0_i32 : i32, i32
  }
}

</mosaic_0001>

<llo_original>
// kernel: tpu_custom_call.1
$region0: #{tpu_custom_call.1}
  #allocation0 [shape = 'u32[]', space=smem, size = 0x4, offset = 0x4, fixed_abs, tag = 'smem constant byte address 0x4 - core index']
  #allocation1 [shape = 'u32[144,128]{1,0:T(1,128)}', space=vmem, size = 0x12000, scoped, tag = 'internal scratch']
  %s0 = inlined_call_operand.hbm [shape: f32[16,32], index: 0, kind: input, shape index: {}]
  %s1 = inlined_call_operand.hbm [shape: bf16[32,128], index: 1, kind: input, shape index: {}]
  %s2 = inlined_call_operand.vmem [shape: f32[1,128], index: 2, kind: input, shape index: {}]
  %s3 = inlined_call_operand.hbm [shape: bf16[2,128,128], index: 3, kind: input, shape index: {}]
  %s4 = inlined_call_operand.vmem [shape: f32[2,1,128], index: 4, kind: input, shape index: {}]
  %s5 = inlined_call_operand.vmem [shape: f32[2,1,128], index: 5, kind: input, shape index: {}]
  %s6 = inlined_call_operand.vmem [shape: f32[2,1,128], index: 6, kind: input, shape index: {}]
  %s7 = inlined_call_operand.hbm [shape: bf16[128,128], index: 7, kind: input, shape index: {}]
  %s8 = inlined_call_operand.vmem [shape: f32[1,128], index: 8, kind: input, shape index: {}]
  %s9 = inlined_call_operand.hbm [shape: f32[16,128], index: 9, kind: output, shape index: {}]
  %s10 = sld [smem:[#allocation0]]
  $region85: #{tpu_custom_call.1} parent=0
    _
  %s12 = ssub.s32 1, %s10
  %s13 = scalar_select 0, %s12, %s10
  $region1: #{tpu_custom_call.1} parent=0
    #allocation2 [shape = 'u8[8192]{0}', space=vmem, size = 0x2000, scoped, tag = 'input window, operand 0']
    #allocation3 [shape = 's32[2]{0}', space=sflag, size = 0x8, scoped, tag = 'scoped memory for tpu_custom_call.1']
    #allocation4 [shape = 's32[2]{0}', space=sflag, size = 0x8, scoped, tag = 'scoped memory for tpu_custom_call.1']
    #allocation5 [shape = 'u8[8192]{0}', space=vmem, size = 0x2000, scoped, tag = 'input window, operand 1, single buffered']
    #allocation6 [shape = 's32[1]{0}', space=sflag, size = 0x4, scoped, tag = 'scoped memory for tpu_custom_call.1']
    #allocation7 [shape = 'u8[65536]{0}', space=vmem, size = 0x10000, scoped, tag = 'input window, operand 3, single buffered']
    #allocation8 [shape = 'u8[32768]{0}', space=vmem, size = 0x8000, scoped, tag = 'input window, operand 7, single buffered']
    #allocation9 [shape = 's32[1]{0}', space=sflag, size = 0x4, scoped, tag = 'scoped memory for tpu_custom_call.1']
    #allocation10 [shape = 'u8[8192]{0}', space=vmem, size = 0x2000, scoped, tag = 'output window, operand 0']
    %14 = vsyncpa [#allocation3], 0
    %s15 = scalar_lea.sflag [#allocation3], 1
    %16 = vsyncpa %s15, 0
    %17 = vsyncpa [#allocation6], 0
    %18 = vsyncpa [#allocation9], 0
    %19 = vsyncpa [#allocation4], 0
    %s20 = scalar_lea.sflag [#allocation4], 1
    %21 = vsyncpa %s20, 0
    loop: start=0, step=1, limit=4
    $region2: #{tpu_custom_call.1} parent=1 // loop_pre_header
      _
    $region3: #{tpu_custom_call.1} parent=1 // loop_header
      %s23 = sphi 0, %s27
      %p24 = scmp.ge.s32.totalorder %s23, 4
      %s33 = sphi 0, %s35
      %s36 = sphi 0, %s33
      %s37 = sphi 0, %s36
      %s53 = sphi 0, %s37
      %s57 = sphi 0, %s57
      %s59 = sphi 0, %s57
      %s60 = sphi 0, %s59
      %s74 = sphi 0, %s60
      %s78 = sphi 0, %s78
      %s80 = sphi 0, %s78
      %s81 = sphi 0, %s80
      %s95 = sphi 0, %s81
      %s99 = sphi 0, %s99
      %s101 = sphi 0, %s99
      %s102 = sphi 0, %s101
      %s116 = sphi 0, %s102
      %s120 = sphi 0, %s120
      %s122 = sphi 0, %s120
      %s123 = sphi 0, %s122
      %s137 = sphi 0, %s123
      %s141 = sphi 0, %s141
      %s143 = sphi 0, %s141
      %s144 = sphi 0, %s143
      %s158 = sphi 0, %s144
      %s162 = sphi 0, %s162
      %s164 = sphi 0, %s162
      %s165 = sphi 0, %s164
      %s179 = sphi 0, %s165
      %s183 = sphi 0, %s183
      %s185 = sphi 0, %s183
      %s186 = sphi 0, %s185
      %s200 = sphi 0, %s186
      %s204 = sphi 0, %s204
      %s206 = sphi 0, %s204
      %s207 = sphi 0, %s206
      %s221 = sphi 0, %s207
      %s227 = sphi 0, %s229
      %s230 = sphi 0, %s227
      %s231 = sphi 0, %s230
      %s247 = sphi 0, %s231
    $region4: #{tpu_custom_call.1} parent=1 // loop_header_branch
      %26 = sbr.rel (%p24) target = $region8
    $region5: #{tpu_custom_call.1} parent=1 // loop_body
      %s28 = ssub.s32 %s23, 1
      %s29 = ssub.s32 %s23, 2
      %s30 = sadd.s32 %s23, 1
      %s31 = ssub.s32 %s23, %s30
      %p32 = scmp.eq.s32.totalorder %s31, 0
      %s34 = sadd.s32 %s33, 1
      %s35 = scalar_select %p32, %s33, %s34
      %p38 = pneg %p32
      %p39 = scmp.eq.s32.totalorder %s23, 1
      %p40 = por %p38, %p39
      %p41 = scmp.ne.s32.totalorder %s33, %s36
      %p42 = scmp.eq.s32.totalorder %s23, 0
      %p43 = por %p41, %p42
      %p44 = scmp.ne.s32.totalorder %s33, %s36
      %p45 = scmp.eq.s32.totalorder %s28, 1
      %p46 = por %p44, %p45
      %p47 = scmp.ne.s32.totalorder %s36, %s37
      %p48 = scmp.eq.s32.totalorder %s28, 0
      %p49 = por %p47, %p48
      %p50 = scmp.ne.s32.totalorder %s36, %s37
      %p51 = scmp.eq.s32.totalorder %s29, 1
      %p52 = por %p50, %p51
      %p54 = scmp.ne.s32.totalorder %s37, %s53
      %p55 = scmp.eq.s32.totalorder %s29, 0
      %p56 = por %p54, %p55
      %s58 = sadd.s32 %s57, 1
      %p61 = scmp.eq.s32.totalorder %s23, 1
      %p62 = scmp.ne.s32.totalorder %s57, %s59
      %p63 = scmp.eq.s32.totalorder %s23, 0
      %p64 = por %p62, %p63
      %p65 = scmp.ne.s32.totalorder %s57, %s59
      %p66 = scmp.eq.s32.totalorder %s28, 1
      %p67 = por %p65, %p66
      %p68 = scmp.ne.s32.totalorder %s59, %s60
      %p69 = scmp.eq.s32.totalorder %s28, 0
      %p70 = por %p68, %p69
      %p71 = scmp.ne.s32.totalorder %s59, %s60
      %p72 = scmp.eq.s32.totalorder %s29, 1
      %p73 = por %p71, %p72
      %p75 = scmp.ne.s32.totalorder %s60, %s74
      %p76 = scmp.eq.s32.totalorder %s29, 0
      %p77 = por %p75, %p76
      %s79 = sadd.s32 %s78, 1
      %p82 = scmp.eq.s32.totalorder %s23, 1
      %p83 = scmp.ne.s32.totalorder %s78, %s80
      %p84 = scmp.eq.s32.totalorder %s23, 0
      %p85 = por %p83, %p84
      %p86 = scmp.ne.s32.totalorder %s78, %s80
      %p87 = scmp.eq.s32.totalorder %s28, 1
      %p88 = por %p86, %p87
      %p89 = scmp.ne.s32.totalorder %s80, %s81
      %p90 = scmp.eq.s32.totalorder %s28, 0
      %p91 = por %p89, %p90
      %p92 = scmp.ne.s32.totalorder %s80, %s81
      %p93 = scmp.eq.s32.totalorder %s29, 1
      %p94 = por %p92, %p93
      %p96 = scmp.ne.s32.totalorder %s81, %s95
      %p97 = scmp.eq.s32.totalorder %s29, 0
      %p98 = por %p96, %p97
      %s100 = sadd.s32 %s99, 1
      %p103 = scmp.eq.s32.totalorder %s23, 1
      %p104 = scmp.ne.s32.totalorder %s99, %s101
      %p105 = scmp.eq.s32.totalorder %s23, 0
      %p106 = por %p104, %p105
      %p107 = scmp.ne.s32.totalorder %s99, %s101
      %p108 = scmp.eq.s32.totalorder %s28, 1
      %p109 = por %p107, %p108
      %p110 = scmp.ne.s32.totalorder %s101, %s102
      %p111 = scmp.eq.s32.totalorder %s28, 0
      %p112 = por %p110, %p111
      %p113 = scmp.ne.s32.totalorder %s101, %s102
      %p114 = scmp.eq.s32.totalorder %s29, 1
      %p115 = por %p113, %p114
      %p117 = scmp.ne.s32.totalorder %s102, %s116
      %p118 = scmp.eq.s32.totalorder %s29, 0
      %p119 = por %p117, %p118
      %s121 = sadd.s32 %s120, 1
      %p124 = scmp.eq.s32.totalorder %s23, 1
      %p125 = scmp.ne.s32.totalorder %s120, %s122
      %p126 = scmp.eq.s32.totalorder %s23, 0
      %p127 = por %p125, %p126
      %p128 = scmp.ne.s32.totalorder %s120, %s122
      %p129 = scmp.eq.s32.totalorder %s28, 1
      %p130 = por %p128, %p129
      %p131 = scmp.ne.s32.totalorder %s122, %s123
      %p132 = scmp.eq.s32.totalorder %s28, 0
      %p133 = por %p131, %p132
      %p134 = scmp.ne.s32.totalorder %s122, %s123
      %p135 = scmp.eq.s32.totalorder %s29, 1
      %p136 = por %p134, %p135
      %p138 = scmp.ne.s32.totalorder %s123, %s137
      %p139 = scmp.eq.s32.totalorder %s29, 0
      %p140 = por %p138, %p139
      %s142 = sadd.s32 %s141, 1
      %p145 = scmp.eq.s32.totalorder %s23, 1
      %p146 = scmp.ne.s32.totalorder %s141, %s143
      %p147 = scmp.eq.s32.totalorder %s23, 0
      %p148 = por %p146, %p147
      %p149 = scmp.ne.s32.totalorder %s141, %s143
      %p150 = scmp.eq.s32.totalorder %s28, 1
      %p151 = por %p149, %p150
      %p152 = scmp.ne.s32.totalorder %s143, %s144
      %p153 = scmp.eq.s32.totalorder %s28, 0
      %p154 = por %p152, %p153
      %p155 = scmp.ne.s32.totalorder %s143, %s144
      %p156 = scmp.eq.s32.totalorder %s29, 1
      %p157 = por %p155, %p156
      %p159 = scmp.ne.s32.totalorder %s144, %s158
      %p160 = scmp.eq.s32.totalorder %s29, 0
      %p161 = por %p159, %p160
      %s163 = sadd.s32 %s162, 1
      %p166 = scmp.eq.s32.totalorder %s23, 1
      %p167 = scmp.ne.s32.totalorder %s162, %s164
      %p168 = scmp.eq.s32.totalorder %s23, 0
      %p169 = por %p167, %p168
      %p170 = scmp.ne.s32.totalorder %s162, %s164
      %p171 = scmp.eq.s32.totalorder %s28, 1
      %p172 = por %p170, %p171
      %p173 = scmp.ne.s32.totalorder %s164, %s165
      %p174 = scmp.eq.s32.totalorder %s28, 0
      %p175 = por %p173, %p174
      %p176 = scmp.ne.s32.totalorder %s164, %s165
      %p177 = scmp.eq.s32.totalorder %s29, 1
      %p178 = por %p176, %p177
      %p180 = scmp.ne.s32.totalorder %s165, %s179
      %p181 = scmp.eq.s32.totalorder %s29, 0
      %p182 = por %p180, %p181
      %s184 = sadd.s32 %s183, 1
      %p187 = scmp.eq.s32.totalorder %s23, 1
      %p188 = scmp.ne.s32.totalorder %s183, %s185
      %p189 = scmp.eq.s32.totalorder %s23, 0
      %p190 = por %p188, %p189
      %p191 = scmp.ne.s32.totalorder %s183, %s185
      %p192 = scmp.eq.s32.totalorder %s28, 1
      %p193 = por %p191, %p192
      %p194 = scmp.ne.s32.totalorder %s185, %s186
      %p195 = scmp.eq.s32.totalorder %s28, 0
      %p196 = por %p194, %p195
      %p197 = scmp.ne.s32.totalorder %s185, %s186
      %p198 = scmp.eq.s32.totalorder %s29, 1
      %p199 = por %p197, %p198
      %p201 = scmp.ne.s32.totalorder %s186, %s200
      %p202 = scmp.eq.s32.totalorder %s29, 0
      %p203 = por %p201, %p202
      %s205 = sadd.s32 %s204, 1
      %p208 = scmp.eq.s32.totalorder %s23, 1
      %p209 = scmp.ne.s32.totalorder %s204, %s206
      %p210 = scmp.eq.s32.totalorder %s23, 0
      %p211 = por %p209, %p210
      %p212 = scmp.ne.s32.totalorder %s204, %s206
      %p213 = scmp.eq.s32.totalorder %s28, 1
      %p214 = por %p212, %p213
      %p215 = scmp.ne.s32.totalorder %s206, %s207
      %p216 = scmp.eq.s32.totalorder %s28, 0
      %p217 = por %p215, %p216
      %p218 = scmp.ne.s32.totalorder %s206, %s207
      %p219 = scmp.eq.s32.totalorder %s29, 1
      %p220 = por %p218, %p219
      %p222 = scmp.ne.s32.totalorder %s207, %s221
      %p223 = scmp.eq.s32.totalorder %s29, 0
      %p224 = por %p222, %p223
      %s225 = ssub.s32 %s23, %s30
      %p226 = scmp.eq.s32.totalorder %s225, 0
      %s228 = sadd.s32 %s227, 1
      %s229 = scalar_select %p226, %s227, %s228
      %p232 = pneg %p226
      %p233 = scmp.eq.s32.totalorder %s23, 1
      %p234 = por %p232, %p233
      %p235 = scmp.ne.s32.totalorder %s227, %s230
      %p236 = scmp.eq.s32.totalorder %s23, 0
      %p237 = por %p235, %p236
      %p238 = scmp.ne.s32.totalorder %s227, %s230
      %p239 = scmp.eq.s32.totalorder %s28, 1
      %p240 = por %p238, %p239
      %p241 = scmp.ne.s32.totalorder %s230, %s231
      %p242 = scmp.eq.s32.totalorder %s28, 0
      %p243 = por %p241, %p242
      %p244 = scmp.ne.s32.totalorder %s230, %s231
      %p245 = scmp.eq.s32.totalorder %s29, 1
      %p246 = por %p244, %p245
      %p248 = scmp.ne.s32.totalorder %s231, %s247
      %p249 = scmp.eq.s32.totalorder %s29, 0
      %p250 = por %p248, %p249
      %p251 = scmp.le.s32.totalorder 1, %s23
      %p252 = scmp.lt.s32.totalorder %s23, 3
      %p253 = pnand %p251, %p252
      %p254 = pneg %p253
      // Predicated region
      $region9: #{tpu_custom_call.1} parent=5 // pred_check
        _
      $region10: #{tpu_custom_call.1} parent=5 // pred_check_branch
        %256 = sbr.rel (%p253) target = $region12
      $region11: #{tpu_custom_call.1} parent=5 // pred_region
        %s257 = ssub.s32 %s23, 1
        // Predicated region
        $region13: #{tpu_custom_call.1} parent=11 // pred_check
          %p258 = pneg %p70
        $region14: #{tpu_custom_call.1} parent=11 // pred_check_branch
          %260 = sbr.rel (%p258) target = $region16
        $region15: #{tpu_custom_call.1} parent=11 // pred_region
          %s262 = ssub.s32 256, 256
          %263 = vsyncadd [#allocation6], %s262
          %s264 = sshll.u32 [#allocation5], 4
          %s265 = int_to_ptr.vmem [resolvable:$true] %s264
          %270 = dma.hbm_to_vmem [thread:$0]  %s1, 256, %s265, [#allocation6], 64, 64, 4
        $region16: #{tpu_custom_call.1} parent=11 // pred_fallthru
          _
        // Predicated region
        $region17: #{tpu_custom_call.1} parent=11 // pred_check
          %p271 = pneg %p91
        $region18: #{tpu_custom_call.1} parent=11 // pred_check_branch
          %273 = sbr.rel (%p271) target = $region20
        $region19: #{tpu_custom_call.1} parent=11 // pred_region
          _
        $region20: #{tpu_custom_call.1} parent=11 // pred_fallthru
          _
        // Predicated region
        $region21: #{tpu_custom_call.1} parent=11 // pred_check
          %p274 = pneg %p112
        $region22: #{tpu_custom_call.1} parent=11 // pred_check_branch
          %276 = sbr.rel (%p274) target = $region24
        $region23: #{tpu_custom_call.1} parent=11 // pred_region
          %s278 = ssub.s32 2048, 2048
          %279 = vsyncadd [#allocation6], %s278
          %s280 = sshll.u32 [#allocation7], 4
          %s281 = int_to_ptr.vmem [resolvable:$true] %s280
          %286 = dma.hbm_to_vmem [thread:$0]  %s3, 2048, %s281, [#allocation6], 64, 64, 4
        $region24: #{tpu_custom_call.1} parent=11 // pred_fallthru
          _
        // Predicated region
        $region25: #{tpu_custom_call.1} parent=11 // pred_check
          %p287 = pneg %p133
        $region26: #{tpu_custom_call.1} parent=11 // pred_check_branch
          %289 = sbr.rel (%p287) target = $region28
        $region27: #{tpu_custom_call.1} parent=11 // pred_region
          _
        $region28: #{tpu_custom_call.1} parent=11 // pred_fallthru
          _
        // Predicated region
        $region29: #{tpu_custom_call.1} parent=11 // pred_check
          %p290 = pneg %p154
        $region30: #{tpu_custom_call.1} parent=11 // pred_check_branch
          %292 = sbr.rel (%p290) target = $region32
        $region31: #{tpu_custom_call.1} parent=11 // pred_region
          _
        $region32: #{tpu_custom_call.1} parent=11 // pred_fallthru
          _
        // Predicated region
        $region33: #{tpu_custom_call.1} parent=11 // pred_check
          %p293 = pneg %p175
        $region34: #{tpu_custom_call.1} parent=11 // pred_check_branch
          %295 = sbr.rel (%p293) target = $region36
        $region35: #{tpu_custom_call.1} parent=11 // pred_region
          _
        $region36: #{tpu_custom_call.1} parent=11 // pred_fallthru
          _
        // Predicated region
        $region37: #{tpu_custom_call.1} parent=11 // pred_check
          %p296 = pneg %p196
        $region38: #{tpu_custom_call.1} parent=11 // pred_check_branch
          %298 = sbr.rel (%p296) target = $region40
        $region39: #{tpu_custom_call.1} parent=11 // pred_region
          %s300 = ssub.s32 1024, 1024
          %301 = vsyncadd [#allocation9], %s300
          %s302 = sshll.u32 [#allocation8], 4
          %s303 = int_to_ptr.vmem [resolvable:$true] %s302
          %308 = dma.hbm_to_vmem [thread:$0]  %s7, 1024, %s303, [#allocation9], 64, 64, 4
        $region40: #{tpu_custom_call.1} parent=11 // pred_fallthru
          _
        // Predicated region
        $region41: #{tpu_custom_call.1} parent=11 // pred_check
          %p309 = pneg %p217
        $region42: #{tpu_custom_call.1} parent=11 // pred_check_branch
          %311 = sbr.rel (%p309) target = $region44
        $region43: #{tpu_custom_call.1} parent=11 // pred_region
          _
        $region44: #{tpu_custom_call.1} parent=11 // pred_fallthru
          _
      $region12: #{tpu_custom_call.1} parent=5 // pred_fallthru
        _
      %p312 = scmp.lt.s32.totalorder %s23, 2
      // Predicated region
      $region45: #{tpu_custom_call.1} parent=5 // pred_check
        %p313 = pneg %p312
      $region46: #{tpu_custom_call.1} parent=5 // pred_check_branch
        %315 = sbr.rel (%p313) target = $region48
      $region47: #{tpu_custom_call.1} parent=5 // pred_region
        // Predicated region
        $region49: #{tpu_custom_call.1} parent=47 // pred_check
          %p316 = pneg %p43
        $region50: #{tpu_custom_call.1} parent=47 // pred_check_branch
          %318 = sbr.rel (%p316) target = $region52
        $region51: #{tpu_custom_call.1} parent=47 // pred_region
          %s319 = sand.u32 %s33, 1
          %s320 = scalar_lea.sflag [#allocation3], %s319
          %s321 = sand.u32 %s33, 1
          %s322 = smul.addr %s321, 8
          %s323 = scalar_lea.vmem [#allocation2], %s322
          %s325 = ssub.s32 128, 128
          %326 = vsyncadd %s320, %s325
          %s327 = smul.addr %s23, 128
          %s328 = scalar_lea.hbm %s0, %s327
          %s330 = sshll.u32 %s323, 4
          %s331 = int_to_ptr.vmem [resolvable:$true] %s330
          %333 = dma.hbm_to_vmem [thread:$0]  %s328, 128, %s331, %s320
        $region52: #{tpu_custom_call.1} parent=47 // pred_fallthru
          _
      $region48: #{tpu_custom_call.1} parent=5 // pred_fallthru
        _
      %p334 = scmp.le.s32.totalorder 1, %s23
      %p335 = scmp.lt.s32.totalorder %s23, 3
      %p336 = pnand %p334, %p335
      %p337 = pneg %p336
      // Predicated region
      $region53: #{tpu_custom_call.1} parent=5 // pred_check
        _
      $region54: #{tpu_custom_call.1} parent=5 // pred_check_branch
        %339 = sbr.rel (%p336) target = $region56
      $region55: #{tpu_custom_call.1} parent=5 // pred_region
        %s340 = ssub.s32 %s23, 1
        %s341 = sand.u32 %s36, 1
        %s342 = scalar_lea.sflag [#allocation3], %s341
        %s343 = sand.u32 %s36, 1
        %s344 = smul.addr %s343, 8
        %s345 = scalar_lea.vmem [#allocation2], %s344
        // Predicated region
        $region57: #{tpu_custom_call.1} parent=55 // pred_check
          %p346 = pneg %p49
        $region58: #{tpu_custom_call.1} parent=55 // pred_check_branch
          %348 = sbr.rel (%p346) target = $region60
        $region59: #{tpu_custom_call.1} parent=55 // pred_region
          %349 = dma.done %s342, 128
        $region60: #{tpu_custom_call.1} parent=55 // pred_fallthru
          _
        // Predicated region
        $region61: #{tpu_custom_call.1} parent=55 // pred_check
          %p350 = pneg %p70
        $region62: #{tpu_custom_call.1} parent=55 // pred_check_branch
          %352 = sbr.rel (%p350) target = $region64
        $region63: #{tpu_custom_call.1} parent=55 // pred_region
          %353 = dma.done [#allocation6], 256
        $region64: #{tpu_custom_call.1} parent=55 // pred_fallthru
          _
        // Predicated region
        $region65: #{tpu_custom_call.1} parent=55 // pred_check
          %p354 = pneg %p112
        $region66: #{tpu_custom_call.1} parent=55 // pred_check_branch
          %356 = sbr.rel (%p354) target = $region68
        $region67: #{tpu_custom_call.1} parent=55 // pred_region
          %357 = dma.done [#allocation6], 2048
        $region68: #{tpu_custom_call.1} parent=55 // pred_fallthru
          _
        // Predicated region
        $region69: #{tpu_custom_call.1} parent=55 // pred_check
          %p358 = pneg %p196
        $region70: #{tpu_custom_call.1} parent=55 // pred_check_branch
          %360 = sbr.rel (%p358) target = $region72
        $region71: #{tpu_custom_call.1} parent=55 // pred_region
          %361 = dma.done [#allocation9], 1024
        $region72: #{tpu_custom_call.1} parent=55 // pred_fallthru
          _
        %s362 = sand.u32 %s36, 1
        %s363 = scalar_lea.sflag [#allocation3], %s362
        %s364 = sand.u32 %s36, 1
        %s365 = smul.addr %s364, 8
        %s366 = scalar_lea.vmem [#allocation2], %s365
        %p367 = pneg %p49
        %p368 = pneg %p46
        %p369 = pneg %p70
        %p370 = pneg %p67
        %p371 = pneg %p91
        %p372 = pneg %p88
        %p373 = pneg %p112
        %p374 = pneg %p109
        %p375 = pneg %p133
        %p376 = pneg %p130
        %p377 = pneg %p154
        %p378 = pneg %p151
        %p379 = pneg %p175
        %p380 = pneg %p172
        %p381 = pneg %p196
        %p382 = pneg %p193
        %p383 = pneg %p217
        %p384 = pneg %p214
        %p385 = pneg %p243
        %p386 = pneg %p240
        %s387 = sand.u32 %s230, 1
        %s388 = scalar_lea.sflag [#allocation4], %s387
        %s389 = sand.u32 %s230, 1
        %s390 = smul.addr %s389, 8
        %s391 = scalar_lea.vmem [#allocation10], %s390
        %v393 = vld [vmem:[%s345] sm:$0xff]
        %v394 = vpack.c.bf16 %v393, %v393
        %v395 = vld [vmem:[#allocation5] sm:$0xf]
        %v396 = vld [vmem:[#allocation5 + $0x4] sm:$0xf]
        %v397 = vld [vmem:[#allocation5 + $0x8] sm:$0xf]
        %v398 = vld [vmem:[#allocation5 + $0xc] sm:$0xf]
        %v399 = vld [vmem:[%s2] sm:$0x1]
        %v401 = vlaneseq
        %v402 = vshrl.u32 %v401, 7
        %v403 = vsub.s32 0, %v402
        %v404 = vrot.slane %v399, %v403
        %v410 = vunpack.c.l.b16 %v395
        %v411 = vunpack.c.l.b16 %v396
        %v412 = vunpack.c.l.b16 %v397
        %v413 = vunpack.c.l.b16 %v398
        %v414 = vpack.c.b16 %v411, %v410
        %v415 = vpack.c.b16 %v413, %v412
        %vm418 = vcmask 261120
        %v420 = vsel %vm418, %v394, 0
        %422 = vmatprep.subr.bf16.mxu0 0
        %423 = vmatpush1.bf16.msra.mxu0 %v414
        %424 = vmatprep.subr.bf16.mxu0 0
        %425 = vmatpush1.bf16.msra.mxu0 %v415
        %426 = vmatprep.subr.bf16.mxu0 0
        %427 = vmatpush1.bf16.msra.mxu0 0
        %428 = vmatprep.subr.bf16.mxu0 0
        %429 = vmatpush1.bf16.msra.mxu0 0
        %430 = vmatprep.subr.bf16.mxu0 0
        %431 = vmatpush1.bf16.msra.mxu0 0
        %432 = vmatprep.subr.bf16.mxu0 0
        %433 = vmatpush1.bf16.msra.mxu0 0
        %434 = vmatprep.subr.bf16.mxu0 0
        %435 = vmatpush1.bf16.msra.mxu0 0
        %436 = vmatprep.subr.bf16.mxu0 0
        %437 = vmatpush1.bf16.msra.mxu0 0
        %438 = vmatprep.subr.bf16.mxu0 0
        %439 = vmatpush1.bf16.msra.mxu0 0
        %440 = vmatprep.subr.bf16.mxu0 0
        %441 = vmatpush1.bf16.msra.mxu0 0
        %442 = vmatprep.subr.bf16.mxu0 0
        %443 = vmatpush1.bf16.msra.mxu0 0
        %444 = vmatprep.subr.bf16.mxu0 0
        %445 = vmatpush1.bf16.msra.mxu0 0
        %446 = vmatprep.subr.bf16.mxu0 0
        %447 = vmatpush1.bf16.msra.mxu0 0
        %448 = vmatprep.subr.bf16.mxu0 0
        %449 = vmatpush1.bf16.msra.mxu0 0
        %450 = vmatprep.subr.bf16.mxu0 0
        %451 = vmatpush1.bf16.msra.mxu0 0
        %452 = vmatprep.subr.bf16.mxu0 0
        %453 = vmatpush1.bf16.msra.mxu0 0
        %454 = vmatprep.mubr.bf16.mxu0 0
        %455 = vmatmul.mubr.bf16.gmra.mrb[0].mxu0 %v420
        %v456 = vpop.f32.mrb[0].mxu0
        %v457 = vadd.f32 %v404, %v456
        %v458 = vpop.f32.mrb[0].mxu0
        %v459 = vpop.f32.mrb[0].mxu0
        %v460 = vpop.f32.mrb[0].mxu0
        %461 = vdwg.mxu0
        %v462 = vtanh.pop %v457
        %v463 = vlaneseq
        %v464 = vshrl.u32 %v463, 7
        %v465 = vand.u32 %v464, 7
        %vm466 = vcmp.ne.s32.totalorder %v465, 0
        %vm467 = vcmp.ne.s32.totalorder %v465, 7
        %v469 = vrot.slane %v462, 7
        %vm471 = vcmask 1040384
        %v472 = vsel %vm471, 0.0, %v469
        %v473 = vsel %vm466, 1, 0
        %vm474 = vcmp.eq.s32.totalorder %v473, 1
        %v475 = vsel %vm474, %v472, 0.0
        %v476 = vrot.slane %v462, 1
        %vm478 = vcmask 1046528
        %v479 = vsel %vm478, %v476, 0.0
        %v480 = vsel %vm467, 1, 0
        %vm481 = vcmp.eq.s32.totalorder %v480, 1
        %v482 = vsel %vm481, %v479, 0.0
        %483 = vrot.lane.b32.xlu0 %v462, 32
        %v484 = vpop.permute.xlu0 %483
        %487 = vrot.lane.b32.xlu0 %v482, 64
        %v488 = vpop.permute.xlu0 %487
        %v490 = vsel %vm418, %v475, %v484
        %vm491 = vcmask 523264
        %v492 = vsel %vm491, %v490, %v488
        %vm493 = vcmask 785408
        %v494 = vsel %vm493, %v492, 0.0
        %v495 = vpack.c.bf16 %v494, %v494
        %v496 = vld [vmem:[#allocation7] sm:$0xf]
        %v497 = vld [vmem:[#allocation7 + $0x4] sm:$0xf]
        %v498 = vld [vmem:[#allocation7 + $0x8] sm:$0xf]
        %v499 = vld [vmem:[#allocation7 + $0xc] sm:$0xf]
        %v500 = vld [vmem:[#allocation7 + $0x10] sm:$0xf]
        %v501 = vld [vmem:[#allocation7 + $0x14] sm:$0xf]
        %v502 = vld [vmem:[#allocation7 + $0x18] sm:$0xf]
        %v503 = vld [vmem:[#allocation7 + $0x1c] sm:$0xf]
        %v504 = vld [vmem:[#allocation7 + $0x20] sm:$0xf]
        %v505 = vld [vmem:[#allocation7 + $0x24] sm:$0xf]
        %v506 = vld [vmem:[#allocation7 + $0x28] sm:$0xf]
        %v507 = vld [vmem:[#allocation7 + $0x2c] sm:$0xf]
        %v508 = vld [vmem:[#allocation7 + $0x30] sm:$0xf]
        %v509 = vld [vmem:[#allocation7 + $0x34] sm:$0xf]
        %v510 = vld [vmem:[#allocation7 + $0x38] sm:$0xf]
        %v511 = vld [vmem:[#allocation7 + $0x3c] sm:$0xf]
        %v512 = vld [vmem:[%s4] sm:$0x1]
        %v514 = vlaneseq
        %v515 = vshrl.u32 %v514, 7
        %v516 = vsub.s32 0, %v515
        %v517 = vrot.slane %v512, %v516
        %v535 = vunpack.c.l.b16 %v496
        %v536 = vunpack.c.l.b16 %v497
        %v537 = vunpack.c.l.b16 %v498
        %v538 = vunpack.c.l.b16 %v499
        %v539 = vunpack.c.l.b16 %v500
        %v540 = vunpack.c.l.b16 %v501
        %v541 = vunpack.c.l.b16 %v502
        %v542 = vunpack.c.l.b16 %v503
        %v543 = vunpack.c.l.b16 %v504
        %v544 = vunpack.c.l.b16 %v505
        %v545 = vunpack.c.l.b16 %v506
        %v546 = vunpack.c.l.b16 %v507
        %v547 = vunpack.c.l.b16 %v508
        %v548 = vunpack.c.l.b16 %v509
        %v549 = vunpack.c.l.b16 %v510
        %v550 = vunpack.c.l.b16 %v511
        %v551 = vpack.c.b16 %v536, %v535
        %v552 = vpack.c.b16 %v538, %v537
        %v553 = vpack.c.b16 %v540, %v539
        %v554 = vpack.c.b16 %v542, %v541
        %v555 = vpack.c.b16 %v544, %v543
        %v556 = vpack.c.b16 %v546, %v545
        %v557 = vpack.c.b16 %v548, %v547
        %v558 = vpack.c.b16 %v550, %v549
        %567 = vmatprep.subr.bf16.mxu0 0
        %568 = vmatpush1.bf16.msra.mxu0 %v551
        %569 = vmatprep.subr.bf16.mxu0 0
        %570 = vmatpush1.bf16.msra.mxu0 %v552
        %571 = vmatprep.subr.bf16.mxu0 0
        %572 = vmatpush1.bf16.msra.mxu0 %v553
        %573 = vmatprep.subr.bf16.mxu0 0
        %574 = vmatpush1.bf16.msra.mxu0 %v554
        %575 = vmatprep.subr.bf16.mxu0 0
        %576 = vmatpush1.bf16.msra.mxu0 %v555
        %577 = vmatprep.subr.bf16.mxu0 0
        %578 = vmatpush1.bf16.msra.mxu0 %v556
        %579 = vmatprep.subr.bf16.mxu0 0
        %580 = vmatpush1.bf16.msra.mxu0 %v557
        %581 = vmatprep.subr.bf16.mxu0 0
        %582 = vmatpush1.bf16.msra.mxu0 %v558
        %583 = vmatprep.subr.bf16.mxu0 0
        %584 = vmatpush1.bf16.msra.mxu0 0
        %585 = vmatprep.subr.bf16.mxu0 0
        %586 = vmatpush1.bf16.msra.mxu0 0
        %587 = vmatprep.subr.bf16.mxu0 0
        %588 = vmatpush1.bf16.msra.mxu0 0
        %589 = vmatprep.subr.bf16.mxu0 0
        %590 = vmatpush1.bf16.msra.mxu0 0
        %591 = vmatprep.subr.bf16.mxu0 0
        %592 = vmatpush1.bf16.msra.mxu0 0
        %593 = vmatprep.subr.bf16.mxu0 0
        %594 = vmatpush1.bf16.msra.mxu0 0
        %595 = vmatprep.subr.bf16.mxu0 0
        %596 = vmatpush1.bf16.msra.mxu0 0
        %597 = vmatprep.subr.bf16.mxu0 0
        %598 = vmatpush1.bf16.msra.mxu0 0
        %599 = vmatprep.mubr.bf16.mxu0 0
        %600 = vmatmul.mubr.bf16.gmra.mrb[0].mxu0 %v495
        %v601 = vpop.f32.mrb[0].mxu0
        %v602 = vadd.f32 %v517, %v601
        %v603 = vpop.f32.mrb[0].mxu0
        %v604 = vpop.f32.mrb[0].mxu0
        %v605 = vpop.f32.mrb[0].mxu0
        %606 = vdwg.mxu0
        %v607 = vmax.f32 %v602, 0.0
        %v608 = vld [vmem:[%s5] sm:$0x1]
        %v610 = vlaneseq
        %v611 = vshrl.u32 %v610, 7
        %v612 = vsub.s32 0, %v611
        %v613 = vrot.slane %v608, %v612
        %v615 = vmul.f32 %v607, %v613
        %v616 = vld [vmem:[%s6] sm:$0x1]
        %v618 = vlaneseq
        %v619 = vshrl.u32 %v618, 7
        %v620 = vsub.s32 0, %v619
        %v621 = vrot.slane %v616, %v620
        %v623 = vadd.f32 %v615, %v621
        %v625 = vrot.slane %v623, 7
        %v627 = vsel %vm471, 0.0, %v625
        %v628 = vsel %vm474, %v627, 0.0
        %v629 = vrot.slane %v623, 1
        %v631 = vsel %vm478, %v629, 0.0
        %v632 = vsel %vm481, %v631, 0.0
        %633 = vrot.lane.b32.xlu0 %v623, 32
        %v634 = vpop.permute.xlu0 %633
        %637 = vrot.lane.b32.xlu0 %v632, 64
        %v638 = vpop.permute.xlu0 %637
        %v640 = vsel %vm418, %v628, %v634
        %v641 = vsel %vm491, %v640, %v638
        %v642 = vsel %vm493, %v641, 0.0
        %v643 = vpack.c.bf16 %v642, %v642
        %s644 = scalar_lea.vmem [#allocation7], 64
        %v645 = vld [vmem:[%s644] sm:$0xf]
        %v646 = vld [vmem:[%s644 + $0x4] sm:$0xf]
        %v647 = vld [vmem:[%s644 + $0x8] sm:$0xf]
        %v648 = vld [vmem:[%s644 + $0xc] sm:$0xf]
        %v649 = vld [vmem:[%s644 + $0x10] sm:$0xf]
        %v650 = vld [vmem:[%s644 + $0x14] sm:$0xf]
        %v651 = vld [vmem:[%s644 + $0x18] sm:$0xf]
        %v652 = vld [vmem:[%s644 + $0x1c] sm:$0xf]
        %v653 = vld [vmem:[%s644 + $0x20] sm:$0xf]
        %v654 = vld [vmem:[%s644 + $0x24] sm:$0xf]
        %v655 = vld [vmem:[%s644 + $0x28] sm:$0xf]
        %v656 = vld [vmem:[%s644 + $0x2c] sm:$0xf]
        %v657 = vld [vmem:[%s644 + $0x30] sm:$0xf]
        %v658 = vld [vmem:[%s644 + $0x34] sm:$0xf]
        %v659 = vld [vmem:[%s644 + $0x38] sm:$0xf]
        %v660 = vld [vmem:[%s644 + $0x3c] sm:$0xf]
        %s661 = scalar_lea.vmem %s4, 1
        %v662 = vld [vmem:[%s661] sm:$0x1]
        %v664 = vlaneseq
        %v665 = vshrl.u32 %v664, 7
        %v666 = vsub.s32 0, %v665
        %v667 = vrot.slane %v662, %v666
        %v685 = vunpack.c.l.b16 %v645
        %v686 = vunpack.c.l.b16 %v646
        %v687 = vunpack.c.l.b16 %v647
        %v688 = vunpack.c.l.b16 %v648
        %v689 = vunpack.c.l.b16 %v649
        %v690 = vunpack.c.l.b16 %v650
        %v691 = vunpack.c.l.b16 %v651
        %v692 = vunpack.c.l.b16 %v652
        %v693 = vunpack.c.l.b16 %v653
        %v694 = vunpack.c.l.b16 %v654
        %v695 = vunpack.c.l.b16 %v655
        %v696 = vunpack.c.l.b16 %v656
        %v697 = vunpack.c.l.b16 %v657
        %v698 = vunpack.c.l.b16 %v658
        %v699 = vunpack.c.l.b16 %v659
        %v700 = vunpack.c.l.b16 %v660
        %v701 = vpack.c.b16 %v686, %v685
        %v702 = vpack.c.b16 %v688, %v687
        %v703 = vpack.c.b16 %v690, %v689
        %v704 = vpack.c.b16 %v692, %v691
        %v705 = vpack.c.b16 %v694, %v693
        %v706 = vpack.c.b16 %v696, %v695
        %v707 = vpack.c.b16 %v698, %v697
        %v708 = vpack.c.b16 %v700, %v699
        %717 = vmatprep.subr.bf16.mxu0 0
        %718 = vmatpush1.bf16.msra.mxu0 %v701
        %719 = vmatprep.subr.bf16.mxu0 0
        %720 = vmatpush1.bf16.msra.mxu0 %v702
        %721 = vmatprep.subr.bf16.mxu0 0
        %722 = vmatpush1.bf16.msra.mxu0 %v703
        %723 = vmatprep.subr.bf16.mxu0 0
        %724 = vmatpush1.bf16.msra.mxu0 %v704
        %725 = vmatprep.subr.bf16.mxu0 0
        %726 = vmatpush1.bf16.msra.mxu0 %v705
        %727 = vmatprep.subr.bf16.mxu0 0
        %728 = vmatpush1.bf16.msra.mxu0 %v706
        %729 = vmatprep.subr.bf16.mxu0 0
        %730 = vmatpush1.bf16.msra.mxu0 %v707
        %731 = vmatprep.subr.bf16.mxu0 0
        %732 = vmatpush1.bf16.msra.mxu0 %v708
        %733 = vmatprep.subr.bf16.mxu0 0
        %734 = vmatpush1.bf16.msra.mxu0 0
        %735 = vmatprep.subr.bf16.mxu0 0
        %736 = vmatpush1.bf16.msra.mxu0 0
        %737 = vmatprep.subr.bf16.mxu0 0
        %738 = vmatpush1.bf16.msra.mxu0 0
        %739 = vmatprep.subr.bf16.mxu0 0
        %740 = vmatpush1.bf16.msra.mxu0 0
        %741 = vmatprep.subr.bf16.mxu0 0
        %742 = vmatpush1.bf16.msra.mxu0 0
        %743 = vmatprep.subr.bf16.mxu0 0
        %744 = vmatpush1.bf16.msra.mxu0 0
        %745 = vmatprep.subr.bf16.mxu0 0
        %746 = vmatpush1.bf16.msra.mxu0 0
        %747 = vmatprep.subr.bf16.mxu0 0
        %748 = vmatpush1.bf16.msra.mxu0 0
        %749 = vmatprep.mubr.bf16.mxu0 0
        %750 = vmatmul.mubr.bf16.gmra.mrb[0].mxu0 %v643
        %v751 = vpop.f32.mrb[0].mxu0
        %v752 = vadd.f32 %v667, %v751
        %v753 = vpop.f32.mrb[0].mxu0
        %v754 = vpop.f32.mrb[0].mxu0
        %v755 = vpop.f32.mrb[0].mxu0
        %756 = vdwg.mxu0
        %v757 = vmax.f32 %v752, 0.0
        %v758 = vpack.c.bf16 %v757, %v757
        %v759 = vld [vmem:[#allocation8] sm:$0xf]
        %v760 = vld [vmem:[#allocation8 + $0x4] sm:$0xf]
        %v761 = vld [vmem:[#allocation8 + $0x8] sm:$0xf]
        %v762 = vld [vmem:[#allocation8 + $0xc] sm:$0xf]
        %v763 = vld [vmem:[#allocation8 + $0x10] sm:$0xf]
        %v764 = vld [vmem:[#allocation8 + $0x14] sm:$0xf]
        %v765 = vld [vmem:[#allocation8 + $0x18] sm:$0xf]
        %v766 = vld [vmem:[#allocation8 + $0x1c] sm:$0xf]
        %v767 = vld [vmem:[#allocation8 + $0x20] sm:$0xf]
        %v768 = vld [vmem:[#allocation8 + $0x24] sm:$0xf]
        %v769 = vld [vmem:[#allocation8 + $0x28] sm:$0xf]
        %v770 = vld [vmem:[#allocation8 + $0x2c] sm:$0xf]
        %v771 = vld [vmem:[#allocation8 + $0x30] sm:$0xf]
        %v772 = vld [vmem:[#allocation8 + $0x34] sm:$0xf]
        %v773 = vld [vmem:[#allocation8 + $0x38] sm:$0xf]
        %v774 = vld [vmem:[#allocation8 + $0x3c] sm:$0xf]
        %v775 = vld [vmem:[%s8] sm:$0x1]
        %v777 = vlaneseq
        %v778 = vshrl.u32 %v777, 7
        %v779 = vsub.s32 0, %v778
        %v780 = vrot.slane %v775, %v779
        %v798 = vunpack.c.l.b16 %v759
        %v799 = vunpack.c.l.b16 %v760
        %v800 = vunpack.c.l.b16 %v761
        %v801 = vunpack.c.l.b16 %v762
        %v802 = vunpack.c.l.b16 %v763
        %v803 = vunpack.c.l.b16 %v764
        %v804 = vunpack.c.l.b16 %v765
        %v805 = vunpack.c.l.b16 %v766
        %v806 = vunpack.c.l.b16 %v767
        %v807 = vunpack.c.l.b16 %v768
        %v808 = vunpack.c.l.b16 %v769
        %v809 = vunpack.c.l.b16 %v770
        %v810 = vunpack.c.l.b16 %v771
        %v811 = vunpack.c.l.b16 %v772
        %v812 = vunpack.c.l.b16 %v773
        %v813 = vunpack.c.l.b16 %v774
        %v814 = vpack.c.b16 %v799, %v798
        %v815 = vpack.c.b16 %v801, %v800
        %v816 = vpack.c.b16 %v803, %v802
        %v817 = vpack.c.b16 %v805, %v804
        %v818 = vpack.c.b16 %v807, %v806
        %v819 = vpack.c.b16 %v809, %v808
        %v820 = vpack.c.b16 %v811, %v810
        %v821 = vpack.c.b16 %v813, %v812
        %830 = vmatprep.subr.bf16.mxu0 0
        %831 = vmatpush1.bf16.msra.mxu0 %v814
        %832 = vmatprep.subr.bf16.mxu0 0
        %833 = vmatpush1.bf16.msra.mxu0 %v815
        %834 = vmatprep.subr.bf16.mxu0 0
        %835 = vmatpush1.bf16.msra.mxu0 %v816
        %836 = vmatprep.subr.bf16.mxu0 0
        %837 = vmatpush1.bf16.msra.mxu0 %v817
        %838 = vmatprep.subr.bf16.mxu0 0
        %839 = vmatpush1.bf16.msra.mxu0 %v818
        %840 = vmatprep.subr.bf16.mxu0 0
        %841 = vmatpush1.bf16.msra.mxu0 %v819
        %842 = vmatprep.subr.bf16.mxu0 0
        %843 = vmatpush1.bf16.msra.mxu0 %v820
        %844 = vmatprep.subr.bf16.mxu0 0
        %845 = vmatpush1.bf16.msra.mxu0 %v821
        %846 = vmatprep.subr.bf16.mxu0 0
        %847 = vmatpush1.bf16.msra.mxu0 0
        %848 = vmatprep.subr.bf16.mxu0 0
        %849 = vmatpush1.bf16.msra.mxu0 0
        %850 = vmatprep.subr.bf16.mxu0 0
        %851 = vmatpush1.bf16.msra.mxu0 0
        %852 = vmatprep.subr.bf16.mxu0 0
        %853 = vmatpush1.bf16.msra.mxu0 0
        %854 = vmatprep.subr.bf16.mxu0 0
        %855 = vmatpush1.bf16.msra.mxu0 0
        %856 = vmatprep.subr.bf16.mxu0 0
        %857 = vmatpush1.bf16.msra.mxu0 0
        %858 = vmatprep.subr.bf16.mxu0 0
        %859 = vmatpush1.bf16.msra.mxu0 0
        %860 = vmatprep.subr.bf16.mxu0 0
        %861 = vmatpush1.bf16.msra.mxu0 0
        %862 = vmatprep.mubr.bf16.mxu0 0
        %863 = vmatmul.mubr.bf16.gmra.mrb[0].mxu0 %v758
        %v864 = vpop.f32.mrb[0].mxu0
        %v865 = vadd.f32 %v780, %v864
        %v866 = vpop.f32.mrb[0].mxu0
        %v867 = vpop.f32.mrb[0].mxu0
        %v868 = vpop.f32.mrb[0].mxu0
        %869 = vdwg.mxu0
        %870 = vst [vmem:[%s391] sm:$0xff] %v865
        %s871 = sand.u32 %s230, 1
        %s872 = scalar_lea.sflag [#allocation4], %s871
        %s873 = sand.u32 %s230, 1
        %s874 = smul.addr %s873, 8
        %s875 = scalar_lea.vmem [#allocation10], %s874
        // Predicated region
        $region73: #{tpu_custom_call.1} parent=55 // pred_check
          %p876 = pneg %p240
        $region74: #{tpu_custom_call.1} parent=55 // pred_check_branch
          %878 = sbr.rel (%p876) target = $region76
        $region75: #{tpu_custom_call.1} parent=55 // pred_region
          %s880 = ssub.s32 128, 128
          %881 = vsyncadd %s872, %s880
          %s882 = smul.addr %s28, 128
          %s883 = scalar_lea.hbm %s9, %s882
          %s885 = sshll.u32 %s875, 4
          %s886 = int_to_ptr.vmem [resolvable:$true] %s885
          %888 = dma.vmem_to_hbm [thread:$0]  %s886, 128, %s883, %s872
        $region76: #{tpu_custom_call.1} parent=55 // pred_fallthru
          _
      $region56: #{tpu_custom_call.1} parent=5 // pred_fallthru
        _
      %p889 = scmp.le.s32.totalorder 2, %s23
      // Predicated region
      $region77: #{tpu_custom_call.1} parent=5 // pred_check
        %p890 = pneg %p889
      $region78: #{tpu_custom_call.1} parent=5 // pred_check_branch
        %892 = sbr.rel (%p890) target = $region80
      $region79: #{tpu_custom_call.1} parent=5 // pred_region
        %s893 = ssub.s32 %s23, 2
        // Predicated region
        $region81: #{tpu_custom_call.1} parent=79 // pred_check
          %p894 = pneg %p246
        $region82: #{tpu_custom_call.1} parent=79 // pred_check_branch
          %896 = sbr.rel (%p894) target = $region84
        $region83: #{tpu_custom_call.1} parent=79 // pred_region
          %s897 = sand.u32 %s231, 1
          %s898 = scalar_lea.sflag [#allocation4], %s897
          %s899 = sand.u32 %s231, 1
          %s900 = smul.addr %s899, 8
          %s901 = scalar_lea.vmem [#allocation10], %s900
          %902 = dma.done %s898, 128
        $region84: #{tpu_custom_call.1} parent=79 // pred_fallthru
          _
      $region80: #{tpu_custom_call.1} parent=5 // pred_fallthru
        _
    $region6: #{tpu_custom_call.1} parent=1 // loop_footer
      %s27 = sadd.s32 1, %s23
    $region7: #{tpu_custom_call.1} parent=1 // loop_footer_branch
      %22 = sbr.rel target = $region3
    $region8: #{tpu_custom_call.1} parent=1 // loop_exit
      _
    %903 = vsyncpa [#allocation3], 1
    %s904 = scalar_lea.sflag [#allocation3], 1
    %905 = vsyncpa %s904, 1
    %906 = vsyncpa [#allocation6], 1
    %907 = vsyncpa [#allocation9], 1
    %908 = vsyncpa [#allocation4], 1
    %s909 = scalar_lea.sflag [#allocation4], 1
    %910 = vsyncpa %s909, 1

</llo_original>
